<compile_context>
chip_gen: v7x
topology: tpu7x:2x2x1
jax: 0.10.0
libtpu: 0.0.40
codegen_flags: <defaults>
</compile_context>

<pallas_src>
import functools

import jax
import jax.numpy as jnp
from jax.experimental import pallas as pl
from jax.experimental.pallas import tpu as pltpu


def _channel_attention_kernel(x_ref, w1_ref, b1_ref, w2_ref, b2_ref, o_ref):
    """Fused: global-avg-pool -> 1x1 conv -> ReLU -> 1x1 conv -> sigmoid -> scale."""
    x = x_ref[...]                                          # (B, C, HW) f32
    hw = x.shape[-1]
    # AdaptiveAvgPool2d(1): mean over spatial positions (lane-axis reduce, XLU).
    pooled = jnp.sum(x, axis=-1) * jnp.float32(1.0 / hw)    # (B, C)
    # Squeeze 1x1 conv + ReLU (tiny MXU matmul, f32 accumulation).
    h = jnp.dot(pooled, w1_ref[...], preferred_element_type=jnp.float32) + b1_ref[...]
    h = jnp.maximum(h, 0.0)                                 # (B, Csq)
    # Excite 1x1 conv + sigmoid.
    y = jnp.dot(h, w2_ref[...], preferred_element_type=jnp.float32) + b2_ref[...]
    y = jax.nn.sigmoid(y)                                   # (B, C)
    # Channel-wise rescale, broadcast along the lane (spatial) axis.
    o_ref[...] = x * y[:, :, None]


def channel_attention(x, w1, b1, w2, b2):
    """ChannelAttention forward.

    x:  (B, C, H, W) NCHW input.
    w1: (C, Csq), b1: (Csq,)   — squeeze 1x1 conv.
    w2: (Csq, C), b2: (C,)     — excite 1x1 conv.

    Weight layout note: a PyTorch nn.Conv2d(cin, cout, 1) weight of shape
    (cout, cin, 1, 1) maps to the (cin, cout) matrices used here via
    w.squeeze(-1).squeeze(-1).T (bias is unchanged).
    """
    B, C, H, W = x.shape
    Csq = w1.shape[1]
    x3 = x.reshape(B, C, H * W).astype(jnp.float32)

    vmem = functools.partial(pl.BlockSpec, memory_space=pltpu.MemorySpace.VMEM)
    out = pl.pallas_call(
        _channel_attention_kernel,
        out_shape=jax.ShapeDtypeStruct((B, C, H * W), jnp.float32),
        in_specs=[vmem(), vmem(), vmem(), vmem(), vmem()],
        out_specs=vmem(),
    )(
        x3,
        w1.astype(jnp.float32),
        b1.reshape(1, Csq).astype(jnp.float32),
        w2.astype(jnp.float32),
        b2.reshape(1, C).astype(jnp.float32),
    )
    return out.reshape(B, C, H, W)


def channel_attention_ref(x, w1, b1, w2, b2):
    """Pure-JAX reference mirroring the PyTorch module (for validation)."""
    pooled = jnp.mean(x, axis=(2, 3))                       # (B, C)
    h = jnp.maximum(pooled @ w1 + b1, 0.0)
    y = jax.nn.sigmoid(h @ w2 + b2)                         # (B, C)
    return x * y[:, :, None, None]


if __name__ == "__main__":
    key = jax.random.PRNGKey(0)
    kx, k1, k2, k3, k4 = jax.random.split(key, 5)

    B, C, H, W = 2, 64, 16, 16        # num_feat = 64
    SQUEEZE = 16                      # squeeze_factor = 16  ->  Csq = 4
    Csq = C // SQUEEZE

    x = jax.random.normal(kx, (B, C, H, W), jnp.float32)
    w1 = jax.random.normal(k1, (C, Csq), jnp.float32) * (1.0 / C ** 0.5)
    b1 = jax.random.normal(k2, (Csq,), jnp.float32) * 0.01
    w2 = jax.random.normal(k3, (Csq, C), jnp.float32) * (1.0 / Csq ** 0.5)
    b2 = jax.random.normal(k4, (C,), jnp.float32) * 0.01

    fwd = jax.jit(channel_attention)
    out = jax.block_until_ready(fwd(x, w1, b1, w2, b2))

    ref = channel_attention_ref(x, w1, b1, w2, b2)
    assert out.shape == (B, C, H, W)
    assert bool(jnp.all(jnp.isfinite(out)))
    assert bool(jnp.allclose(out, ref, atol=1e-5, rtol=1e-5))
    print("KERNEL_OK")
</pallas_src>

<mosaic_0001>
module attributes {stable_mosaic.version = 11 : i64} {
  func.func @_channel_attention_kernel(%arg0: memref<2x64x256xf32, #tpu.memory_space<vmem>>, %arg1: memref<64x4xf32, #tpu.memory_space<vmem>>, %arg2: memref<1x4xf32, #tpu.memory_space<vmem>>, %arg3: memref<4x64xf32, #tpu.memory_space<vmem>>, %arg4: memref<1x64xf32, #tpu.memory_space<vmem>>, %arg5: memref<2x64x256xf32, #tpu.memory_space<vmem>>) attributes {dimension_semantics = [], scalar_prefetch = 0 : i64, scratch_operands = 0 : i64, tpu.core_type = #tpu.core_type<tc>} {
    %c0 = arith.constant 0 : index
    %c0_0 = arith.constant 0 : index
    %c0_1 = arith.constant 0 : index
    %0 = vector.load %arg0[%c0, %c0_0, %c0_1] : memref<2x64x256xf32, #tpu.memory_space<vmem>>, vector<2x64x256xf32>
    %cst = arith.constant dense<0.000000e+00> : vector<2x64xf32>
    %1 = vector.multi_reduction <add>, %0, %cst [2] : vector<2x64x256xf32> to vector<2x64xf32>
    %cst_2 = arith.constant 3.906250e-03 : f32
    %2 = vector.broadcast %cst_2 : f32 to vector<2x64xf32>
    %3 = arith.mulf %1, %2 : vector<2x64xf32>
    %c0_3 = arith.constant 0 : index
    %c0_4 = arith.constant 0 : index
    %4 = vector.load %arg1[%c0_3, %c0_4] : memref<64x4xf32, #tpu.memory_space<vmem>>, vector<64x4xf32>
    %cst_5 = arith.constant dense<0.000000e+00> : vector<2x4xf32>
    %5 = tpu.matmul %3, %4, %cst_5 {dimension_numbers = #tpu.dot_dimension_numbers<[1], [0], [0], [1], [0, 0, 1, 1], [], []>} : vector<2x64xf32>, vector<64x4xf32>, vector<2x4xf32> -> vector<2x4xf32>
    %c0_6 = arith.constant 0 : index
    %c0_7 = arith.constant 0 : index
    %6 = vector.load %arg2[%c0_6, %c0_7] : memref<1x4xf32, #tpu.memory_space<vmem>>, vector<1x4xf32>
    %7 = vector.broadcast %6 : vector<1x4xf32> to vector<2x4xf32>
    %8 = arith.addf %5, %7 : vector<2x4xf32>
    %cst_8 = arith.constant 0.000000e+00 : f32
    %9 = vector.broadcast %cst_8 : f32 to vector<2x4xf32>
    %10 = arith.maximumf %8, %9 : vector<2x4xf32>
    %c0_9 = arith.constant 0 : index
    %c0_10 = arith.constant 0 : index
    %11 = vector.load %arg3[%c0_9, %c0_10] : memref<4x64xf32, #tpu.memory_space<vmem>>, vector<4x64xf32>
    %cst_11 = arith.constant dense<0.000000e+00> : vector<2x64xf32>
    %12 = tpu.matmul %10, %11, %cst_11 {dimension_numbers = #tpu.dot_dimension_numbers<[1], [0], [0], [1], [0, 0, 1, 1], [], []>} : vector<2x4xf32>, vector<4x64xf32>, vector<2x64xf32> -> vector<2x64xf32>
    %c0_12 = arith.constant 0 : index
    %c0_13 = arith.constant 0 : index
    %13 = vector.load %arg4[%c0_12, %c0_13] : memref<1x64xf32, #tpu.memory_space<vmem>>, vector<1x64xf32>
    %14 = vector.broadcast %13 : vector<1x64xf32> to vector<2x64xf32>
    %15 = arith.addf %12, %14 : vector<2x64xf32>
    %16 = arith.negf %15 : vector<2x64xf32>
    %17 = math.exp %16 : vector<2x64xf32>
    %cst_14 = arith.constant 1.000000e+00 : f32
    %18 = vector.broadcast %cst_14 : f32 to vector<2x64xf32>
    %19 = arith.addf %18, %17 : vector<2x64xf32>
    %20 = arith.divf %18, %19 : vector<2x64xf32>
    %21 = vector.shape_cast %20 : vector<2x64xf32> to vector<2x64x1xf32>
    %22 = vector.broadcast %21 : vector<2x64x1xf32> to vector<2x64x256xf32>
    %23 = arith.mulf %0, %22 : vector<2x64x256xf32>
    %c0_15 = arith.constant 0 : index
    %c0_16 = arith.constant 0 : index
    %c0_17 = arith.constant 0 : index
    %24 = vector.load %arg5[%c0_15, %c0_16, %c0_17] : memref<2x64x256xf32, #tpu.memory_space<vmem>>, vector<2x64x256xf32>
    tpu.vector_store %arg5[%c0_15, %c0_16, %c0_17], %23 {strides = array<i32>} : memref<2x64x256xf32, #tpu.memory_space<vmem>>, vector<2x64x256xf32>,
    return
  }
}

</mosaic_0001>

<llo_original>
// kernel: channel_attention.1
$region0: #{channel_attention.1}
  #allocation0 [shape = 'u32[]', space=smem, size = 0x4, offset = 0x4, fixed_abs, tag = 'smem constant byte address 0x4 - core index']
  #allocation1 [shape = 'u32[144,128]{1,0:T(1,128)}', space=vmem, size = 0x12000, scoped, tag = 'internal scratch']
  %s0 = inlined_call_operand.vmem [shape: f32[2,64,256], index: 0, kind: input, shape index: {}]
  %s1 = inlined_call_operand.vmem [shape: f32[64,4], index: 1, kind: input, shape index: {}]
  %s2 = inlined_call_operand.vmem [shape: f32[1,4], index: 2, kind: input, shape index: {}]
  %s3 = inlined_call_operand.vmem [shape: f32[4,64], index: 3, kind: input, shape index: {}]
  %s4 = inlined_call_operand.vmem [shape: f32[1,64], index: 4, kind: input, shape index: {}]
  %s5 = inlined_call_operand.vmem [shape: f32[2,64,256], index: 5, kind: output, shape index: {}]
  %s6 = sld [smem:[#allocation0]]
  $region30: #{channel_attention.1} parent=0
    _
  %s8 = ssub.s32 1, %s6
  %s9 = scalar_select 0, %s8, %s6
  // Predicated region
  $region2: #{channel_attention.1} parent=0 // pred_check
    _
  $region3: #{channel_attention.1} parent=0 // pred_check_branch
    %11 = sbr.rel (0) target = $region5
  $region4: #{channel_attention.1} parent=0 // pred_region
    _
  $region5: #{channel_attention.1} parent=0 // pred_fallthru
    _
  // Predicated region
  $region6: #{channel_attention.1} parent=0 // pred_check
    _
  $region7: #{channel_attention.1} parent=0 // pred_check_branch
    %13 = sbr.rel (0) target = $region9
  $region8: #{channel_attention.1} parent=0 // pred_region
    _
  $region9: #{channel_attention.1} parent=0 // pred_fallthru
    _
  // Predicated region
  $region10: #{channel_attention.1} parent=0 // pred_check
    _
  $region11: #{channel_attention.1} parent=0 // pred_check_branch
    %15 = sbr.rel (0) target = $region13
  $region12: #{channel_attention.1} parent=0 // pred_region
    _
  $region13: #{channel_attention.1} parent=0 // pred_fallthru
    _
  // Predicated region
  $region14: #{channel_attention.1} parent=0 // pred_check
    _
  $region15: #{channel_attention.1} parent=0 // pred_check_branch
    %17 = sbr.rel (0) target = $region17
  $region16: #{channel_attention.1} parent=0 // pred_region
    _
  $region17: #{channel_attention.1} parent=0 // pred_fallthru
    _
  // Predicated region
  $region18: #{channel_attention.1} parent=0 // pred_check
    _
  $region19: #{channel_attention.1} parent=0 // pred_check_branch
    %19 = sbr.rel (0) target = $region21
  $region20: #{channel_attention.1} parent=0 // pred_region
    _
  $region21: #{channel_attention.1} parent=0 // pred_fallthru
    _
  %v20 = vld [vmem:[%s0] sm:$0xff]
  %v21 = vld [vmem:[%s0 + $0x8] sm:$0xff]
  %v22 = vld [vmem:[%s0 + $0x10] sm:$0xff]
  %v23 = vld [vmem:[%s0 + $0x18] sm:$0xff]
  %v24 = vld [vmem:[%s0 + $0x20] sm:$0xff]
  %v25 = vld [vmem:[%s0 + $0x28] sm:$0xff]
  %v26 = vld [vmem:[%s0 + $0x30] sm:$0xff]
  %v27 = vld [vmem:[%s0 + $0x38] sm:$0xff]
  %v28 = vld [vmem:[%s0 + $0x40] sm:$0xff]
  %v29 = vld [vmem:[%s0 + $0x48] sm:$0xff]
  %v30 = vld [vmem:[%s0 + $0x50] sm:$0xff]
  %v31 = vld [vmem:[%s0 + $0x58] sm:$0xff]
  %v32 = vld [vmem:[%s0 + $0x60] sm:$0xff]
  %v33 = vld [vmem:[%s0 + $0x68] sm:$0xff]
  %v34 = vld [vmem:[%s0 + $0x70] sm:$0xff]
  %v35 = vld [vmem:[%s0 + $0x78] sm:$0xff]
  %v36 = vld [vmem:[%s0 + $0x80] sm:$0xff]
  %v37 = vld [vmem:[%s0 + $0x88] sm:$0xff]
  %v38 = vld [vmem:[%s0 + $0x90] sm:$0xff]
  %v39 = vld [vmem:[%s0 + $0x98] sm:$0xff]
  %v40 = vld [vmem:[%s0 + $0xa0] sm:$0xff]
  %v41 = vld [vmem:[%s0 + $0xa8] sm:$0xff]
  %v42 = vld [vmem:[%s0 + $0xb0] sm:$0xff]
  %v43 = vld [vmem:[%s0 + $0xb8] sm:$0xff]
  %v44 = vld [vmem:[%s0 + $0xc0] sm:$0xff]
  %v45 = vld [vmem:[%s0 + $0xc8] sm:$0xff]
  %v46 = vld [vmem:[%s0 + $0xd0] sm:$0xff]
  %v47 = vld [vmem:[%s0 + $0xd8] sm:$0xff]
  %v48 = vld [vmem:[%s0 + $0xe0] sm:$0xff]
  %v49 = vld [vmem:[%s0 + $0xe8] sm:$0xff]
  %v50 = vld [vmem:[%s0 + $0xf0] sm:$0xff]
  %v51 = vld [vmem:[%s0 + $0xf8] sm:$0xff]
  %v52 = vadd.f32 %v20, %v21
  %53 = vadd.xlane.f32.xlu0 %v52
  %v54 = vpop.xlane.xlu0 %53
  %v55 = vadd.f32 %v22, %v23
  %56 = vadd.xlane.f32.xlu0 %v55
  %v57 = vpop.xlane.xlu0 %56
  %v58 = vadd.f32 %v24, %v25
  %59 = vadd.xlane.f32.xlu0 %v58
  %v60 = vpop.xlane.xlu0 %59
  %v61 = vadd.f32 %v26, %v27
  %62 = vadd.xlane.f32.xlu0 %v61
  %v63 = vpop.xlane.xlu0 %62
  %v64 = vadd.f32 %v28, %v29
  %65 = vadd.xlane.f32.xlu0 %v64
  %v66 = vpop.xlane.xlu0 %65
  %v67 = vadd.f32 %v30, %v31
  %68 = vadd.xlane.f32.xlu0 %v67
  %v69 = vpop.xlane.xlu0 %68
  %v70 = vadd.f32 %v32, %v33
  %71 = vadd.xlane.f32.xlu0 %v70
  %v72 = vpop.xlane.xlu0 %71
  %v73 = vadd.f32 %v34, %v35
  %74 = vadd.xlane.f32.xlu0 %v73
  %v75 = vpop.xlane.xlu0 %74
  %v76 = vadd.f32 %v36, %v37
  %77 = vadd.xlane.f32.xlu0 %v76
  %v78 = vpop.xlane.xlu0 %77
  %v79 = vadd.f32 %v38, %v39
  %80 = vadd.xlane.f32.xlu0 %v79
  %v81 = vpop.xlane.xlu0 %80
  %v82 = vadd.f32 %v40, %v41
  %83 = vadd.xlane.f32.xlu0 %v82
  %v84 = vpop.xlane.xlu0 %83
  %v85 = vadd.f32 %v42, %v43
  %86 = vadd.xlane.f32.xlu0 %v85
  %v87 = vpop.xlane.xlu0 %86
  %v88 = vadd.f32 %v44, %v45
  %89 = vadd.xlane.f32.xlu0 %v88
  %v90 = vpop.xlane.xlu0 %89
  %v91 = vadd.f32 %v46, %v47
  %92 = vadd.xlane.f32.xlu0 %v91
  %v93 = vpop.xlane.xlu0 %92
  %v94 = vadd.f32 %v48, %v49
  %95 = vadd.xlane.f32.xlu0 %v94
  %v96 = vpop.xlane.xlu0 %95
  %v97 = vadd.f32 %v50, %v51
  %98 = vadd.xlane.f32.xlu0 %v97
  %v99 = vpop.xlane.xlu0 %98
  %v100 = vmul.f32 %v54, 0.00390625
  %v101 = vmul.f32 %v57, 0.00390625
  %v102 = vmul.f32 %v60, 0.00390625
  %v103 = vmul.f32 %v63, 0.00390625
  %v104 = vmul.f32 %v66, 0.00390625
  %v105 = vmul.f32 %v69, 0.00390625
  %v106 = vmul.f32 %v72, 0.00390625
  %v107 = vmul.f32 %v75, 0.00390625
  %v108 = vmul.f32 %v78, 0.00390625
  %v109 = vmul.f32 %v81, 0.00390625
  %v110 = vmul.f32 %v84, 0.00390625
  %v111 = vmul.f32 %v87, 0.00390625
  %v112 = vmul.f32 %v90, 0.00390625
  %v113 = vmul.f32 %v93, 0.00390625
  %v114 = vmul.f32 %v96, 0.00390625
  %v115 = vmul.f32 %v99, 0.00390625
  %v116 = vld [vmem:[%s1] sm:$0xff]
  %v117 = vld [vmem:[%s1 + $0x8] sm:$0xff]
  %v118 = vld [vmem:[%s1 + $0x10] sm:$0xff]
  %v119 = vld [vmem:[%s1 + $0x18] sm:$0xff]
  %v120 = vld [vmem:[%s1 + $0x20] sm:$0xff]
  %v121 = vld [vmem:[%s1 + $0x28] sm:$0xff]
  %v122 = vld [vmem:[%s1 + $0x30] sm:$0xff]
  %v123 = vld [vmem:[%s1 + $0x38] sm:$0xff]
  %v124 = vld [vmem:[%s2] sm:$0x1]
  %v126 = vlaneseq
  %v127 = vshrl.u32 %v126, 7
  %v128 = vsub.s32 0, %v127
  %v129 = vrot.slane %v124, %v128
  %v147 = vlaneseq
  %v148 = vand.u32 %v147, 127
  %v149 = vlaneseq
  %v150 = vshrl.u32 %v149, 7
  %v151 = vsub.s32 %v148, %v150
  %v152 = vrot.slane %v100, %v151
  %v153 = vadd.s32 %v148, 4294967288
  %v154 = vlaneseq
  %v155 = vshrl.u32 %v154, 7
  %v156 = vsub.s32 %v153, %v155
  %v157 = vrot.slane %v101, %v156
  %vm158 = vcmask 130112
  %v159 = vsel %vm158, %v157, %v152
  %v160 = vadd.s32 %v148, 4294967280
  %v161 = vlaneseq
  %v162 = vshrl.u32 %v161, 7
  %v163 = vsub.s32 %v160, %v162
  %v164 = vrot.slane %v102, %v163
  %vm165 = vcmask 195712
  %v166 = vsel %vm165, %v164, %v159
  %v167 = vadd.s32 %v148, 4294967272
  %v168 = vlaneseq
  %v169 = vshrl.u32 %v168, 7
  %v170 = vsub.s32 %v167, %v169
  %v171 = vrot.slane %v103, %v170
  %vm172 = vcmask 261312
  %v173 = vsel %vm172, %v171, %v166
  %v174 = vadd.s32 %v148, 4294967264
  %v175 = vlaneseq
  %v176 = vshrl.u32 %v175, 7
  %v177 = vsub.s32 %v174, %v176
  %v178 = vrot.slane %v104, %v177
  %vm179 = vcmask 326912
  %v180 = vsel %vm179, %v178, %v173
  %v181 = vadd.s32 %v148, 4294967256
  %v182 = vlaneseq
  %v183 = vshrl.u32 %v182, 7
  %v184 = vsub.s32 %v181, %v183
  %v185 = vrot.slane %v105, %v184
  %vm186 = vcmask 392512
  %v187 = vsel %vm186, %v185, %v180
  %v188 = vadd.s32 %v148, 4294967248
  %v189 = vlaneseq
  %v190 = vshrl.u32 %v189, 7
  %v191 = vsub.s32 %v188, %v190
  %v192 = vrot.slane %v106, %v191
  %vm193 = vcmask 458112
  %v194 = vsel %vm193, %v192, %v187
  %v195 = vadd.s32 %v148, 4294967240
  %v196 = vlaneseq
  %v197 = vshrl.u32 %v196, 7
  %v198 = vsub.s32 %v195, %v197
  %v199 = vrot.slane %v107, %v198
  %vm200 = vcmask 523712
  %v201 = vsel %vm200, %v199, %v194
  %v202 = vlaneseq
  %v203 = vshrl.u32 %v202, 7
  %v204 = vsub.s32 %v148, %v203
  %v205 = vrot.slane %v108, %v204
  %v206 = vlaneseq
  %v207 = vshrl.u32 %v206, 7
  %v208 = vsub.s32 %v153, %v207
  %v209 = vrot.slane %v109, %v208
  %v210 = vsel %vm158, %v209, %v205
  %v211 = vlaneseq
  %v212 = vshrl.u32 %v211, 7
  %v213 = vsub.s32 %v160, %v212
  %v214 = vrot.slane %v110, %v213
  %v215 = vsel %vm165, %v214, %v210
  %v216 = vlaneseq
  %v217 = vshrl.u32 %v216, 7
  %v218 = vsub.s32 %v167, %v217
  %v219 = vrot.slane %v111, %v218
  %v220 = vsel %vm172, %v219, %v215
  %v221 = vlaneseq
  %v222 = vshrl.u32 %v221, 7
  %v223 = vsub.s32 %v174, %v222
  %v224 = vrot.slane %v112, %v223
  %v225 = vsel %vm179, %v224, %v220
  %v226 = vlaneseq
  %v227 = vshrl.u32 %v226, 7
  %v228 = vsub.s32 %v181, %v227
  %v229 = vrot.slane %v113, %v228
  %v230 = vsel %vm186, %v229, %v225
  %v231 = vlaneseq
  %v232 = vshrl.u32 %v231, 7
  %v233 = vsub.s32 %v188, %v232
  %v234 = vrot.slane %v114, %v233
  %v235 = vsel %vm193, %v234, %v230
  %v236 = vlaneseq
  %v237 = vshrl.u32 %v236, 7
  %v238 = vsub.s32 %v195, %v237
  %v239 = vrot.slane %v115, %v238
  %v240 = vsel %vm200, %v239, %v235
  %vm241 = vcmask 1041409
  %v242 = vsel %vm241, %v240, %v201
  %vm243 = vcmask 523264
  %v244 = vsel %vm243, %v242, 0
  %246 = vmatprep.subr.mxu0 0.0
  %247 = vmatpush1.msra.mxu0 %v116
  %248 = vmatprep.subr.mxu0 0.0
  %249 = vmatpush1.msra.mxu0 %v117
  %250 = vmatprep.subr.mxu0 0.0
  %251 = vmatpush1.msra.mxu0 %v118
  %252 = vmatprep.subr.mxu0 0.0
  %253 = vmatpush1.msra.mxu0 %v119
  %254 = vmatprep.subr.mxu0 0.0
  %255 = vmatpush1.msra.mxu0 %v120
  %256 = vmatprep.subr.mxu0 0.0
  %257 = vmatpush1.msra.mxu0 %v121
  %258 = vmatprep.subr.mxu0 0.0
  %259 = vmatpush1.msra.mxu0 %v122
  %260 = vmatprep.subr.mxu0 0.0
  %261 = vmatpush1.msra.mxu0 %v123
  %262 = vmatprep.subr.mxu0 0.0
  %263 = vmatpush1.msra.mxu0 0.0
  %264 = vmatprep.subr.mxu0 0.0
  %265 = vmatpush1.msra.mxu0 0.0
  %266 = vmatprep.subr.mxu0 0.0
  %267 = vmatpush1.msra.mxu0 0.0
  %268 = vmatprep.subr.mxu0 0.0
  %269 = vmatpush1.msra.mxu0 0.0
  %270 = vmatprep.subr.mxu0 0.0
  %271 = vmatpush1.msra.mxu0 0.0
  %272 = vmatprep.subr.mxu0 0.0
  %273 = vmatpush1.msra.mxu0 0.0
  %274 = vmatprep.subr.mxu0 0.0
  %275 = vmatpush1.msra.mxu0 0.0
  %276 = vmatprep.subr.mxu0 0.0
  %277 = vmatpush1.msra.mxu0 0.0
  %278 = vmatprep.subr.mxu0 0.0
  %279 = vmatpush1.msra.mxu0 0.0
  %280 = vmatprep.subr.mxu0 0.0
  %281 = vmatpush1.msra.mxu0 0.0
  %282 = vmatprep.subr.mxu0 0.0
  %283 = vmatpush1.msra.mxu0 0.0
  %284 = vmatprep.subr.mxu0 0.0
  %285 = vmatpush1.msra.mxu0 0.0
  %286 = vmatprep.subr.mxu0 0.0
  %287 = vmatpush1.msra.mxu0 0.0
  %288 = vmatprep.subr.mxu0 0.0
  %289 = vmatpush1.msra.mxu0 0.0
  %290 = vmatprep.subr.mxu0 0.0
  %291 = vmatpush1.msra.mxu0 0.0
  %292 = vmatprep.subr.mxu0 0.0
  %293 = vmatpush1.msra.mxu0 0.0
  %294 = vmatprep.subr.mxu0 0.0
  %295 = vmatpush1.msra.mxu0 0.0
  %296 = vmatprep.subr.mxu0 0.0
  %297 = vmatpush1.msra.mxu0 0.0
  %298 = vmatprep.subr.mxu0 0.0
  %299 = vmatpush1.msra.mxu0 0.0
  %300 = vmatprep.subr.mxu0 0.0
  %301 = vmatpush1.msra.mxu0 0.0
  %302 = vmatprep.subr.mxu0 0.0
  %303 = vmatpush1.msra.mxu0 0.0
  %304 = vmatprep.subr.mxu0 0.0
  %305 = vmatpush1.msra.mxu0 0.0
  %306 = vmatprep.subr.mxu0 0.0
  %307 = vmatpush1.msra.mxu0 0.0
  %308 = vmatprep.subr.mxu0 0.0
  %309 = vmatpush1.msra.mxu0 0.0
  %310 = vmatprep.mubr.f32.mxu0 0.0
  %311 = vmatmul.mubr.f32.gmra.mrb[0].mxu0 %v244
  %v312 = vpop.f32.mrb[0].mxu0
  %v313 = vadd.f32 %v129, %v312
  %v314 = vpop.f32.mrb[0].mxu0
  %315 = vdwg.mxu0
  %v316 = vmax.f32 %v313, 0.0
  %v317 = vld [vmem:[%s3] sm:$0xf]
  %v318 = vld [vmem:[%s4] sm:$0x1]
  %v320 = vlaneseq
  %v321 = vshrl.u32 %v320, 7
  %v322 = vsub.s32 0, %v321
  %v323 = vrot.slane %v318, %v322
  %vm325 = vcmask 31744
  %v327 = vsel %vm325, %v316, 0
  %vm329 = vcmask 1043456
  %v331 = vsel %vm329, %v317, 0
  %333 = vmatprep.subr.mxu0 0.0
  %334 = vmatpush1.msra.mxu0 %v331
  %335 = vmatprep.subr.mxu0 0.0
  %336 = vmatpush1.msra.mxu0 0.0
  %337 = vmatprep.subr.mxu0 0.0
  %338 = vmatpush1.msra.mxu0 0.0
  %339 = vmatprep.subr.mxu0 0.0
  %340 = vmatpush1.msra.mxu0 0.0
  %341 = vmatprep.subr.mxu0 0.0
  %342 = vmatpush1.msra.mxu0 0.0
  %343 = vmatprep.subr.mxu0 0.0
  %344 = vmatpush1.msra.mxu0 0.0
  %345 = vmatprep.subr.mxu0 0.0
  %346 = vmatpush1.msra.mxu0 0.0
  %347 = vmatprep.subr.mxu0 0.0
  %348 = vmatpush1.msra.mxu0 0.0
  %349 = vmatprep.subr.mxu0 0.0
  %350 = vmatpush1.msra.mxu0 0.0
  %351 = vmatprep.subr.mxu0 0.0
  %352 = vmatpush1.msra.mxu0 0.0
  %353 = vmatprep.subr.mxu0 0.0
  %354 = vmatpush1.msra.mxu0 0.0
  %355 = vmatprep.subr.mxu0 0.0
  %356 = vmatpush1.msra.mxu0 0.0
  %357 = vmatprep.subr.mxu0 0.0
  %358 = vmatpush1.msra.mxu0 0.0
  %359 = vmatprep.subr.mxu0 0.0
  %360 = vmatpush1.msra.mxu0 0.0
  %361 = vmatprep.subr.mxu0 0.0
  %362 = vmatpush1.msra.mxu0 0.0
  %363 = vmatprep.subr.mxu0 0.0
  %364 = vmatpush1.msra.mxu0 0.0
  %365 = vmatprep.subr.mxu0 0.0
  %366 = vmatpush1.msra.mxu0 0.0
  %367 = vmatprep.subr.mxu0 0.0
  %368 = vmatpush1.msra.mxu0 0.0
  %369 = vmatprep.subr.mxu0 0.0
  %370 = vmatpush1.msra.mxu0 0.0
  %371 = vmatprep.subr.mxu0 0.0
  %372 = vmatpush1.msra.mxu0 0.0
  %373 = vmatprep.subr.mxu0 0.0
  %374 = vmatpush1.msra.mxu0 0.0
  %375 = vmatprep.subr.mxu0 0.0
  %376 = vmatpush1.msra.mxu0 0.0
  %377 = vmatprep.subr.mxu0 0.0
  %378 = vmatpush1.msra.mxu0 0.0
  %379 = vmatprep.subr.mxu0 0.0
  %380 = vmatpush1.msra.mxu0 0.0
  %381 = vmatprep.subr.mxu0 0.0
  %382 = vmatpush1.msra.mxu0 0.0
  %383 = vmatprep.subr.mxu0 0.0
  %384 = vmatpush1.msra.mxu0 0.0
  %385 = vmatprep.subr.mxu0 0.0
  %386 = vmatpush1.msra.mxu0 0.0
  %387 = vmatprep.subr.mxu0 0.0
  %388 = vmatpush1.msra.mxu0 0.0
  %389 = vmatprep.subr.mxu0 0.0
  %390 = vmatpush1.msra.mxu0 0.0
  %391 = vmatprep.subr.mxu0 0.0
  %392 = vmatpush1.msra.mxu0 0.0
  %393 = vmatprep.subr.mxu0 0.0
  %394 = vmatpush1.msra.mxu0 0.0
  %395 = vmatprep.subr.mxu0 0.0
  %396 = vmatpush1.msra.mxu0 0.0
  %397 = vmatprep.mubr.f32.mxu0 0.0
  %398 = vmatmul.mubr.f32.gmra.mrb[0].mxu0 %v327
  %v399 = vpop.f32.mrb[0].mxu0
  %v400 = vadd.f32 %v323, %v399
  %v401 = vpop.f32.mrb[0].mxu0
  %402 = vdwg.mxu0
  %v403 = vxor.u32 %v400, 2147483648
  %v404 = vmul.f32 %v403, 1.442695
  %v405 = vpow.pop %v404
  %v406 = vadd.f32 %v405, 1.0
  %v407 = vrcp.pop %v406
  %v408 = vmul.f32 1.0, %v407
  %v409 = vlaneseq
  %v410 = vshrl.u32 %v409, 7
  %v411 = vsub.s32 0, %v410
  %v412 = vrot.slane %v408, %v411
  %414 = vbcast.lane.b32.xlu0 %v412, 256
  %v415 = vpop.permute.xlu0 %414
  %s417 = sor.u32 256, 8
  %418 = vbcast.lane.b32.xlu0 %v412, %s417
  %v419 = vpop.permute.xlu0 %418
  %s421 = sor.u32 256, 16
  %422 = vbcast.lane.b32.xlu0 %v412, %s421
  %v423 = vpop.permute.xlu0 %422
  %s425 = sor.u32 256, 24
  %426 = vbcast.lane.b32.xlu0 %v412, %s425
  %v427 = vpop.permute.xlu0 %426
  %s429 = sor.u32 256, 32
  %430 = vbcast.lane.b32.xlu0 %v412, %s429
  %v431 = vpop.permute.xlu0 %430
  %s433 = sor.u32 256, 40
  %434 = vbcast.lane.b32.xlu0 %v412, %s433
  %v435 = vpop.permute.xlu0 %434
  %s437 = sor.u32 256, 48
  %438 = vbcast.lane.b32.xlu0 %v412, %s437
  %v439 = vpop.permute.xlu0 %438
  %s441 = sor.u32 256, 56
  %442 = vbcast.lane.b32.xlu0 %v412, %s441
  %v443 = vpop.permute.xlu0 %442
  %v444 = vlaneseq
  %v445 = vshrl.u32 %v444, 7
  %v446 = vsub.s32 1, %v445
  %v447 = vrot.slane %v408, %v446
  %449 = vbcast.lane.b32.xlu0 %v447, 256
  %v450 = vpop.permute.xlu0 %449
  %s452 = sor.u32 256, 8
  %453 = vbcast.lane.b32.xlu0 %v447, %s452
  %v454 = vpop.permute.xlu0 %453
  %s456 = sor.u32 256, 16
  %457 = vbcast.lane.b32.xlu0 %v447, %s456
  %v458 = vpop.permute.xlu0 %457
  %s460 = sor.u32 256, 24
  %461 = vbcast.lane.b32.xlu0 %v447, %s460
  %v462 = vpop.permute.xlu0 %461
  %s464 = sor.u32 256, 32
  %465 = vbcast.lane.b32.xlu0 %v447, %s464
  %v466 = vpop.permute.xlu0 %465
  %s468 = sor.u32 256, 40
  %469 = vbcast.lane.b32.xlu0 %v447, %s468
  %v470 = vpop.permute.xlu0 %469
  %s472 = sor.u32 256, 48
  %473 = vbcast.lane.b32.xlu0 %v447, %s472
  %v474 = vpop.permute.xlu0 %473
  %s476 = sor.u32 256, 56
  %477 = vbcast.lane.b32.xlu0 %v447, %s476
  %v478 = vpop.permute.xlu0 %477
  %v479 = vmul.f32 %v20, %v415
  %v480 = vmul.f32 %v21, %v415
  %v481 = vmul.f32 %v22, %v419
  %v482 = vmul.f32 %v23, %v419
  %v483 = vmul.f32 %v24, %v423
  %v484 = vmul.f32 %v25, %v423
  %v485 = vmul.f32 %v26, %v427
  %v486 = vmul.f32 %v27, %v427
  %v487 = vmul.f32 %v28, %v431
  %v488 = vmul.f32 %v29, %v431
  %v489 = vmul.f32 %v30, %v435
  %v490 = vmul.f32 %v31, %v435
  %v491 = vmul.f32 %v32, %v439
  %v492 = vmul.f32 %v33, %v439
  %v493 = vmul.f32 %v34, %v443
  %v494 = vmul.f32 %v35, %v443
  %v495 = vmul.f32 %v36, %v450
  %v496 = vmul.f32 %v37, %v450
  %v497 = vmul.f32 %v38, %v454
  %v498 = vmul.f32 %v39, %v454
  %v499 = vmul.f32 %v40, %v458
  %v500 = vmul.f32 %v41, %v458
  %v501 = vmul.f32 %v42, %v462
  %v502 = vmul.f32 %v43, %v462
  %v503 = vmul.f32 %v44, %v466
  %v504 = vmul.f32 %v45, %v466
  %v505 = vmul.f32 %v46, %v470
  %v506 = vmul.f32 %v47, %v470
  %v507 = vmul.f32 %v48, %v474
  %v508 = vmul.f32 %v49, %v474
  %v509 = vmul.f32 %v50, %v478
  %v510 = vmul.f32 %v51, %v478
  %511 = vst [vmem:[%s5] sm:$0xff] %v479
  %512 = vst [vmem:[%s5 + $0x8] sm:$0xff] %v480
  %513 = vst [vmem:[%s5 + $0x10] sm:$0xff] %v481
  %514 = vst [vmem:[%s5 + $0x18] sm:$0xff] %v482
  %515 = vst [vmem:[%s5 + $0x20] sm:$0xff] %v483
  %516 = vst [vmem:[%s5 + $0x28] sm:$0xff] %v484
  %517 = vst [vmem:[%s5 + $0x30] sm:$0xff] %v485
  %518 = vst [vmem:[%s5 + $0x38] sm:$0xff] %v486
  %519 = vst [vmem:[%s5 + $0x40] sm:$0xff] %v487
  %520 = vst [vmem:[%s5 + $0x48] sm:$0xff] %v488
  %521 = vst [vmem:[%s5 + $0x50] sm:$0xff] %v489
  %522 = vst [vmem:[%s5 + $0x58] sm:$0xff] %v490
  %523 = vst [vmem:[%s5 + $0x60] sm:$0xff] %v491
  %524 = vst [vmem:[%s5 + $0x68] sm:$0xff] %v492
  %525 = vst [vmem:[%s5 + $0x70] sm:$0xff] %v493
  %526 = vst [vmem:[%s5 + $0x78] sm:$0xff] %v494
  %527 = vst [vmem:[%s5 + $0x80] sm:$0xff] %v495
  %528 = vst [vmem:[%s5 + $0x88] sm:$0xff] %v496
  %529 = vst [vmem:[%s5 + $0x90] sm:$0xff] %v497
  %530 = vst [vmem:[%s5 + $0x98] sm:$0xff] %v498
  %531 = vst [vmem:[%s5 + $0xa0] sm:$0xff] %v499
  %532 = vst [vmem:[%s5 + $0xa8] sm:$0xff] %v500
  %533 = vst [vmem:[%s5 + $0xb0] sm:$0xff] %v501
  %534 = vst [vmem:[%s5 + $0xb8] sm:$0xff] %v502
  %535 = vst [vmem:[%s5 + $0xc0] sm:$0xff] %v503
  %536 = vst [vmem:[%s5 + $0xc8] sm:$0xff] %v504
  %537 = vst [vmem:[%s5 + $0xd0] sm:$0xff] %v505
  %538 = vst [vmem:[%s5 + $0xd8] sm:$0xff] %v506
  %539 = vst [vmem:[%s5 + $0xe0] sm:$0xff] %v507
  %540 = vst [vmem:[%s5 + $0xe8] sm:$0xff] %v508
  %541 = vst [vmem:[%s5 + $0xf0] sm:$0xff] %v509
  %542 = vst [vmem:[%s5 + $0xf8] sm:$0xff] %v510
  // Predicated region
  $region22: #{channel_attention.1} parent=0 // pred_check
    _
  $region23: #{channel_attention.1} parent=0 // pred_check_branch
    %544 = sbr.rel (0) target = $region25
  $region24: #{channel_attention.1} parent=0 // pred_region
    _
  $region25: #{channel_attention.1} parent=0 // pred_fallthru
    _
  // Predicated region
  $region26: #{channel_attention.1} parent=0 // pred_check
    _
  $region27: #{channel_attention.1} parent=0 // pred_check_branch
    %546 = sbr.rel (0) target = $region29
  $region28: #{channel_attention.1} parent=0 // pred_region
    _
  $region29: #{channel_attention.1} parent=0 // pred_fallthru
    _

</llo_original>
